<compile_context>
chip_gen: v5e
topology: v5e:2x2
jax: 0.10.0
libtpu: 0.0.40
codegen_flags: <defaults>
</compile_context>

<pallas_src>
import jax
import jax.numpy as jnp
from jax.experimental import pallas as pl
from jax.experimental.pallas import tpu as pltpu

_LANE = 128
_TARGET_BLOCK_BYTES = 4 * 1024 * 1024     # ~4 MiB lane-dense blocks (dtype-aware)
_VMEM_LIMIT_BYTES = 32 * 1024 * 1024      # 4 buffers x 4 MiB = 16 MiB + headroom
_MIN_PALLAS_ELEMS = 64 * 1024             # below ~256 KiB f32, fused XLA wins


def _mish_kernel(x_ref, o_ref):
    x = x_ref[...].astype(jnp.float32)
    # tanh(softplus(x)) = (e^{2x} + 2 e^{x}) / (e^{2x} + 2 e^{x} + 2)
    # Stable form with m = exp(-|x|)  (single EUP transcendental per element):
    #   x >= 0 :  t = (1 + 2m)   / (1 + 2m + 2m^2)
    #   x <  0 :  t = (m^2 + 2m) / (m^2 + 2m + 2)
    m = jnp.exp(-jnp.abs(x))                      # EUP op #1 (and only)
    m2 = m * m
    pos = x >= 0.0
    num = jnp.where(pos, 1.0 + 2.0 * m, m2 + 2.0 * m)
    den = num + jnp.where(pos, 2.0 * m2, 2.0)     # den in (1, 5] -> well conditioned
    # VPU-only reciprocal: magic-constant initial guess (~6% rel. error) plus
    # 3 Newton steps (error squared each step -> ~1e-10), keeping the EUP slot
    # free for exp() — matters on v7x where HBM BW approaches EUP throughput.
    i = pltpu.bitcast(den, jnp.int32)
    r = pltpu.bitcast(jnp.int32(0x7EF311C3) - i, jnp.float32)
    r = r * (2.0 - den * r)
    r = r * (2.0 - den * r)
    r = r * (2.0 - den * r)
    o_ref[...] = (x * num * r).astype(o_ref.dtype)


def _mish_jnp(x: jax.Array) -> jax.Array:
    xf = x.astype(jnp.float32)
    return (xf * jnp.tanh(jax.nn.softplus(xf))).astype(x.dtype)


def _round_up(a: int, b: int) -> int:
    return -(-a // b) * b


def _pick_cols(n: int) -> int:
    """Largest lane-dense column count (multiple of 128) that divides n."""
    for c in (4096, 2048, 1024, 512, 256, 128):
        if n % c == 0:
            return c
    return _LANE


def mish_pallas(x: jax.Array, *, min_pallas_elems: int = _MIN_PALLAS_ELEMS) -> jax.Array:
    """Elementwise Mish. Large lane-aligned tensors run in a Pallas kernel."""
    n = x.size
    if n == 0:
        return x

    if n < min_pallas_elems or n % _LANE != 0:
        # Small (KB-scale A2C activations) or lane-unaligned: let XLA fuse it.
        # TODO(synk): huge non-128-multiple tensors could use a prefix kernel +
        # jnp tail instead of this full fallback; the module never produces them.
        return _mish_jnp(x)

    orig_shape = x.shape
    dtype = x.dtype
    cols = _pick_cols(n)
    rows = n // cols
    x2d = x.reshape(rows, cols)          # free reshape; no pad, no slice

    if rows < 16:
        # Too few rows to split into two >=8-row blocks: single full-extent block.
        tr, grid = rows, 1
    else:
        # Byte-sized blocks (~4 MiB regardless of dtype); grid forced >= 2 and
        # even so both v7x TensorCores get work and DMA pipelines with compute.
        block_elems = max(_TARGET_BLOCK_BYTES // jnp.dtype(dtype).itemsize, 8 * cols)
        n_blocks = max(1, -(-n // block_elems))
        grid_target = max(2, 2 * (-(-n_blocks // 2)))
        tr = _round_up(-(-rows // grid_target), 8)      # multiple of 8, <= rows
        grid = -(-rows // tr)                           # partial last block OK

    out2d = pl.pallas_call(
        _mish_kernel,
        out_shape=jax.ShapeDtypeStruct((rows, cols), dtype),
        grid_spec=pltpu.PrefetchScalarGridSpec(
            num_scalar_prefetch=0,
            grid=(grid,),
            in_specs=[pl.BlockSpec((tr, cols), lambda i: (i, 0))],
            out_specs=pl.BlockSpec((tr, cols), lambda i: (i, 0)),
        ),
        compiler_params=pltpu.CompilerParams(
            dimension_semantics=("parallel",),
            vmem_limit_bytes=_VMEM_LIMIT_BYTES,
        ),
    )(x2d)
    return out2d.reshape(orig_shape)


if __name__ == "__main__":
    key = jax.random.PRNGKey(0)
    k1, k2, k3, k4 = jax.random.split(key, 4)

    # Small shapes implied by the A2C-pendulum MLP (batch, hidden): these take
    # the fused-jnp bypass on purpose.
    x_small = jax.random.normal(k1, (2, 32), dtype=jnp.float32) * 3.0
    x_odd = jax.random.normal(k2, (5, 3), dtype=jnp.float32) * 3.0
    # Tiny but lane-aligned, forced through the Pallas kernel (single block).
    x_forced = jax.random.normal(k3, (2, 128), dtype=jnp.float32) * 3.0
    # Large enough to exercise the real Pallas path (grid >= 2, no pad/slice).
    x_big = jax.random.normal(k4, (256, 1024), dtype=jnp.float32) * 3.0

    outs = [
        (mish_pallas(x_small), x_small),
        (mish_pallas(x_odd), x_odd),
        (mish_pallas(x_forced, min_pallas_elems=0), x_forced),  # Pallas kernel
        (mish_pallas(x_big), x_big),                            # Pallas kernel
    ]
    for y, _ in outs:
        jax.block_until_ready(y)

    for y, x in outs:
        y_ref = _mish_jnp(x)
        assert y.shape == x.shape and y.dtype == x.dtype
        assert jnp.allclose(y, y_ref, atol=1e-5, rtol=1e-5), "mismatch vs reference"

    print("KERNEL_OK")
</pallas_src>

<mosaic_0001>
module attributes {stable_mosaic.version = 11 : i64} {
  func.func @_mish_kernel(%arg0: i32, %arg1: memref<1x256xf32, #tpu.memory_space<vmem>>, %arg2: memref<1x256xf32, #tpu.memory_space<vmem>>) attributes {dimension_semantics = [#tpu.dimension_semantics<parallel>], iteration_bounds = array<i64: 1>, scalar_prefetch = 0 : i64, scratch_operands = 0 : i64, tpu.core_type = #tpu.core_type<tc>, window_params = [{transform_indices = @transform_0, window_bounds = array<i64: 1, 256>}, {transform_indices = @transform_1, window_bounds = array<i64: 1, 256>}]} {
    %c0 = arith.constant 0 : index
    %c0_0 = arith.constant 0 : index
    %0 = vector.load %arg1[%c0, %c0_0] : memref<1x256xf32, #tpu.memory_space<vmem>>, vector<1x256xf32>
    %1 = math.absf %0 : vector<1x256xf32>
    %cst = arith.constant 0.000000e+00 : f32
    %2 = vector.broadcast %cst : f32 to vector<1x256xf32>
    %3 = arith.subf %2, %1 : vector<1x256xf32>
    %4 = math.exp %3 : vector<1x256xf32>
    %5 = arith.mulf %4, %4 : vector<1x256xf32>
    %cst_1 = arith.constant 0.000000e+00 : f32
    %6 = vector.broadcast %cst_1 : f32 to vector<1x256xf32>
    %7 = arith.cmpf oge, %0, %6 : vector<1x256xf32>
    %cst_2 = arith.constant 2.000000e+00 : f32
    %8 = vector.broadcast %cst_2 : f32 to vector<1x256xf32>
    %9 = arith.mulf %8, %4 : vector<1x256xf32>
    %cst_3 = arith.constant 1.000000e+00 : f32
    %10 = vector.broadcast %cst_3 : f32 to vector<1x256xf32>
    %11 = arith.addf %10, %9 : vector<1x256xf32>
    %cst_4 = arith.constant 2.000000e+00 : f32
    %12 = vector.broadcast %cst_4 : f32 to vector<1x256xf32>
    %13 = arith.mulf %12, %4 : vector<1x256xf32>
    %14 = arith.addf %5, %13 : vector<1x256xf32>
    %15 = arith.select %7, %11, %14 : vector<1x256xi1>, vector<1x256xf32>
    %cst_5 = arith.constant 2.000000e+00 : f32
    %16 = vector.broadcast %cst_5 : f32 to vector<1x256xf32>
    %17 = arith.mulf %16, %5 : vector<1x256xf32>
    %cst_6 = arith.constant 2.000000e+00 : f32
    %18 = vector.broadcast %cst_6 : f32 to vector<1x256xf32>
    %19 = arith.select %7, %17, %18 : vector<1x256xi1>, vector<1x256xf32>
    %20 = arith.addf %15, %19 : vector<1x256xf32>
    %21 = tpu.bitcast %20 : vector<1x256xf32> -> vector<1x256xi32>
    %c2129859011_i32 = arith.constant 2129859011 : i32
    %22 = vector.broadcast %c2129859011_i32 : i32 to vector<1x256xi32>
    %23 = arith.subi %22, %21 : vector<1x256xi32>
    %24 = tpu.bitcast %23 : vector<1x256xi32> -> vector<1x256xf32>
    %25 = arith.mulf %20, %24 : vector<1x256xf32>
    %cst_7 = arith.constant 2.000000e+00 : f32
    %26 = vector.broadcast %cst_7 : f32 to vector<1x256xf32>
    %27 = arith.subf %26, %25 : vector<1x256xf32>
    %28 = arith.mulf %24, %27 : vector<1x256xf32>
    %29 = arith.mulf %20, %28 : vector<1x256xf32>
    %cst_8 = arith.constant 2.000000e+00 : f32
    %30 = vector.broadcast %cst_8 : f32 to vector<1x256xf32>
    %31 = arith.subf %30, %29 : vector<1x256xf32>
    %32 = arith.mulf %28, %31 : vector<1x256xf32>
    %33 = arith.mulf %20, %32 : vector<1x256xf32>
    %cst_9 = arith.constant 2.000000e+00 : f32
    %34 = vector.broadcast %cst_9 : f32 to vector<1x256xf32>
    %35 = arith.subf %34, %33 : vector<1x256xf32>
    %36 = arith.mulf %32, %35 : vector<1x256xf32>
    %37 = arith.mulf %0, %15 : vector<1x256xf32>
    %38 = arith.mulf %37, %36 : vector<1x256xf32>
    %c0_10 = arith.constant 0 : index
    %c0_11 = arith.constant 0 : index
    %39 = vector.load %arg2[%c0_10, %c0_11] : memref<1x256xf32, #tpu.memory_space<vmem>>, vector<1x256xf32>
    tpu.vector_store %arg2[%c0_10, %c0_11], %38 {strides = array<i32>} : memref<1x256xf32, #tpu.memory_space<vmem>>, vector<1x256xf32>,
    return
  }
  func.func @transform_0(%arg0: i32) -> (i32, i32) {
    %c0_i32 = arith.constant 0 : i32
    %c0_i32_0 = arith.constant 0 : i32
    return %arg0, %c0_i32 : i32, i32
  }
  func.func @transform_1(%arg0: i32) -> (i32, i32) {
    %c0_i32 = arith.constant 0 : i32
    %c0_i32_0 = arith.constant 0 : i32
    return %arg0, %c0_i32 : i32, i32
  }
}

</mosaic_0001>

<llo_original>
// kernel: tpu_custom_call.1
$region0: #{tpu_custom_call.1}
  #allocation0 [shape = 'u32[]', space=smem, size = 0x4, offset = 0x4, fixed_abs, tag = 'smem constant byte address 0x4 - core index']
  #allocation1 [shape = 'u32[72,128]{1,0:T(1,128)}', space=vmem, size = 0x9000, scoped, tag = 'internal scratch']
  %s0 = inlined_call_operand.hbm [shape: f32[1,256], index: 0, kind: input, shape index: {}]
  %s1 = inlined_call_operand.hbm [shape: f32[1,256], index: 1, kind: output, shape index: {}]
  %s2 = sld [smem:[#allocation0]]
  $region18: #{tpu_custom_call.1} parent=0
    _
  %s4 = ssub.s32 1, %s2
  %s5 = scalar_select 0, %s4, %s2
  $region1: #{tpu_custom_call.1} parent=0
    #allocation2 [shape = 'u8[1024]{0}', space=vmem, size = 0x400, scoped, tag = 'input window, operand 0, single buffered']
    #allocation3 [shape = 's32[1]{0}', space=sflag, size = 0x4, scoped, tag = 'scoped memory for tpu_custom_call.1']
    #allocation4 [shape = 's32[1]{0}', space=sflag, size = 0x4, scoped, tag = 'scoped memory for tpu_custom_call.1']
    #allocation5 [shape = 'u8[1024]{0}', space=vmem, size = 0x400, scoped, tag = 'output window, operand 0, single buffered']
    %6 = vsyncpa [#allocation3], 0
    %7 = vsyncpa [#allocation4], 0
    // Predicated region
    $region2: #{tpu_custom_call.1} parent=1 // pred_check
      _
    $region3: #{tpu_custom_call.1} parent=1 // pred_check_branch
      %9 = sbr.rel (0) target = $region5
    $region4: #{tpu_custom_call.1} parent=1 // pred_region
      %11 = vsyncadd [#allocation3], 0
      %s13 = sshll.u32 %s0, 4
      %s14 = int_to_ptr.hbm [resolvable:$true] %s13
      %s15 = sshll.u32 [#allocation2], 4
      %s16 = int_to_ptr.vmem [resolvable:$true] %s15
      %18 = dma.hbm_to_vmem [thread:$0]  %s14, 32, %s16, [#allocation3]
    $region5: #{tpu_custom_call.1} parent=1 // pred_fallthru
      _
    // Predicated region
    $region6: #{tpu_custom_call.1} parent=1 // pred_check
      _
    $region7: #{tpu_custom_call.1} parent=1 // pred_check_branch
      %20 = sbr.rel (0) target = $region9
    $region8: #{tpu_custom_call.1} parent=1 // pred_region
      %22 = dma.done [#allocation3], 32
    $region9: #{tpu_custom_call.1} parent=1 // pred_fallthru
      _
    %v23 = vld [vmem:[#allocation2] sm:$0x3]
    %v24 = vand.u32 2147483647, %v23
    %v25 = vsub.f32 0.0, %v24
    %v26 = vmul.f32 %v25, 1.442695
    %v27 = vpow.pop %v26
    %v28 = vmul.f32 %v27, %v27
    %vm29 = vcmp.ge.f32.partialorder %v23, 0.0
    %v30 = vmul.f32 %v27, 2.0
    %v31 = vadd.f32 %v30, 1.0
    %v32 = vadd.f32 %v28, %v30
    %v33 = vsel %vm29, %v31, %v32
    %v34 = vmul.f32 %v28, 2.0
    %v35 = vsel %vm29, %v34, 2.0
    %v36 = vadd.f32 %v33, %v35
    %v38 = vperm.slane %v36, 0
    %v39 = vperm.slane %v36, 1
    %v40 = vsub.s32 2129859011, %v38
    %v41 = vsub.s32 2129859011, %v39
    %v44 = vrot.slane %v41, 7
    %vm45 = vcmask 1040384
    %v46 = vsel %vm45, %v40, %v44
    %v48 = vmul.f32 %v36, %v46
    %v49 = vsub.f32 2.0, %v48
    %v51 = vperm.slane %v49, 0
    %v52 = vperm.slane %v49, 1
    %v55 = vmul.f32 %v40, %v51
    %v56 = vmul.f32 %v41, %v52
    %v59 = vrot.slane %v56, 7
    %v60 = vsel %vm45, %v55, %v59
    %v62 = vmul.f32 %v36, %v60
    %v63 = vsub.f32 2.0, %v62
    %v65 = vperm.slane %v63, 0
    %v66 = vperm.slane %v63, 1
    %v69 = vmul.f32 %v55, %v65
    %v70 = vmul.f32 %v56, %v66
    %v73 = vrot.slane %v70, 7
    %v74 = vsel %vm45, %v69, %v73
    %v76 = vmul.f32 %v36, %v74
    %v77 = vsub.f32 2.0, %v76
    %v79 = vperm.slane %v77, 0
    %v80 = vperm.slane %v77, 1
    %v83 = vmul.f32 %v69, %v79
    %v84 = vmul.f32 %v70, %v80
    %v85 = vmul.f32 %v23, %v33
    %v88 = vrot.slane %v84, 7
    %v89 = vsel %vm45, %v83, %v88
    %v91 = vmul.f32 %v85, %v89
    %v92 = vlaneseq
    %vm93 = vcmp.ge.s32.totalorder %v92, 0
    %vm94 = vcmp.lt.s32.totalorder %v92, 256
    %vm95 = vmand %vm93, %vm94
    %96 = vst.msk [vmem:[#allocation5] sm:$0x3] %vm95, %v91
    // Predicated region
    $region10: #{tpu_custom_call.1} parent=1 // pred_check
      _
    $region11: #{tpu_custom_call.1} parent=1 // pred_check_branch
      %98 = sbr.rel (0) target = $region13
    $region12: #{tpu_custom_call.1} parent=1 // pred_region
      %100 = vsyncadd [#allocation4], 0
      %s102 = sshll.u32 [#allocation5], 4
      %s103 = int_to_ptr.vmem [resolvable:$true] %s102
      %s104 = sshll.u32 %s1, 4
      %s105 = int_to_ptr.hbm [resolvable:$true] %s104
      %107 = dma.vmem_to_hbm [thread:$0]  %s103, 32, %s105, [#allocation4]
    $region13: #{tpu_custom_call.1} parent=1 // pred_fallthru
      _
    // Predicated region
    $region14: #{tpu_custom_call.1} parent=1 // pred_check
      _
    $region15: #{tpu_custom_call.1} parent=1 // pred_check_branch
      %109 = sbr.rel (0) target = $region17
    $region16: #{tpu_custom_call.1} parent=1 // pred_region
      %111 = dma.done [#allocation4], 32
    $region17: #{tpu_custom_call.1} parent=1 // pred_fallthru
      _
    %112 = vsyncpa [#allocation3], 1
    %113 = vsyncpa [#allocation4], 1

</llo_original>
